<compile_context>
chip_gen: v7x
topology: tpu7x:2x2x1
jax: 0.10.0
libtpu: 0.0.40
codegen_flags: <defaults>
</compile_context>

<pallas_src>
import jax
import jax.numpy as jnp
import numpy as np
from jax.experimental import pallas as pl
from jax.experimental.pallas import tpu as pltpu


# ----------------------------------------------------------------------------
# Pallas kernel: the feed_forward hot path (identity pass — the base class
# declares `self.network_blocks = []`, i.e. no blocks).
# ----------------------------------------------------------------------------
def _feed_forward_kernel(x_ref, o_ref):
    # Whole-tile load -> store through VMEM.
    o_ref[...] = x_ref[...]


# ~2 MiB of f32 per block; with input+output double-buffered that is ~8 MiB of
# VMEM, comfortably inside the scoped default on v5e/v6e/v7x.
_TARGET_BLOCK_ELEMS = 512 * 1024


def _feed_forward_pallas(x2d):
    """x2d: lane-dense slab [R, W] with W a multiple of 128 (float32)."""
    R, W = x2d.shape
    assert W % 128 == 0, "last dim must be a multiple of the 128-wide lane axis"

    # Rows per block: multiple of 8 targeting ~2 MiB blocks, or the full row
    # extent if the slab is smaller than one block.
    target_rows = max(8, (_TARGET_BLOCK_ELEMS // W) // 8 * 8)
    tile_r = R if R <= target_rows else target_rows
    grid = (pl.cdiv(R, tile_r),)  # partial last block handled by Pallas

    return pl.pallas_call(
        _feed_forward_kernel,
        out_shape=jax.ShapeDtypeStruct((R, W), x2d.dtype),
        grid=grid,
        in_specs=[pl.BlockSpec((tile_r, W), lambda i: (i, 0))],
        out_specs=pl.BlockSpec((tile_r, W), lambda i: (i, 0)),
        input_output_aliases={0: 0},  # output aliases the input HBM buffer
        compiler_params=pltpu.CompilerParams(
            dimension_semantics=("parallel",),  # let both TCs split the grid (v7x)
        ),
    )(x2d)


def _widest_lane_dim(n):
    """Widest lane dim (multiple of 128, up to 4096) that divides n."""
    for cand in (4096, 2048, 1024, 512, 256, 128):
        if n % cand == 0:
            return cand
    return 128


# ----------------------------------------------------------------------------
# JAX-side mirror of BasePytorchNetwork's orchestration.
# ----------------------------------------------------------------------------
class BasePallasNetwork:
    def __init__(self):
        self.evaluation = False
        self.training = True
        self.loss_names = []       # base class declares no losses
        self.max_length = []
        self.comparison = []
        self.network_blocks = []   # base class declares no blocks / parameters
        self._x = None
        self._y = None
        self._losses = {}

    # --- pipeline stages (abstract in the base class; minimal concrete
    #     realisations that preserve the forward() data flow) ----------------
    def set_input(self, x):
        self._x = x

    def feed_forward(self):
        x = self._x
        shape = x.shape
        flat = x.reshape(-1)              # bitcast-level reshape, no HBM traffic
        n = flat.shape[0]

        pad = (-n) % 128
        if pad:
            # Rare ragged case only: pad once so the slab is lane-dense.
            flat = jnp.pad(flat, (0, pad))
        n_p = flat.shape[0]

        w = _widest_lane_dim(n_p)
        slab = flat.reshape(n_p // w, w)  # bitcast-level reshape

        out_slab = _feed_forward_pallas(slab)

        if pad:
            out_flat = out_slab.reshape(-1)[:n]
            self._y = out_flat.reshape(shape)
        else:
            self._y = out_slab.reshape(shape)

    def calculate_losses(self):
        # loss_names == [] in the base class: no loss terms defined.
        self._losses = {}

    def set_output(self):
        # "a tuple of output variables, first one being the results and the
        #  second one being the loss"
        return self._y, self._losses

    # --- forward / inference, mirroring the PyTorch control flow ------------
    def forward(self, x=None):
        self.set_input(x)
        if self.training:
            self.feed_forward()
            self.calculate_losses()
        else:
            # torch.no_grad() equivalent: no autodiff taping here, no-op.
            self.feed_forward()
            self.calculate_losses()
        return self.set_output()

    def inference(self, x):
        self.set_input(x)
        self.feed_forward()
        return self.set_output()

    # --- state toggles -------------------------------------------------------
    def train_state(self):
        self.training = True
        self.evaluation = True

    def evaluation_state(self):
        self.training = False
        self.evaluation = True

    def inference_state(self):
        self.training = False
        self.evaluation = False


if __name__ == "__main__":
    key = jax.random.PRNGKey(0)
    # NCHW input, small shapes: batch=2, channels=4, spatial=16x16.
    x = jax.random.normal(key, (2, 4, 16, 16), dtype=jnp.float32)
    # Host-side copy for verification (the kernel aliases the input buffer).
    x_host = np.asarray(x)

    net = BasePallasNetwork()
    net.inference_state()
    y, losses = net.inference(x)
    y = jax.block_until_ready(y)

    assert y.shape == x_host.shape and y.dtype == jnp.float32
    assert np.allclose(np.asarray(y), x_host), "feed_forward pass-through mismatch"
    assert losses == {}
    print("KERNEL_OK")
</pallas_src>

<mosaic_0001>
module attributes {stable_mosaic.version = 11 : i64} {
  func.func @_feed_forward_kernel(%arg0: i32, %arg1: memref<1x2048xf32, #tpu.memory_space<vmem>>, %arg2: memref<1x2048xf32, #tpu.memory_space<vmem>>) attributes {dimension_semantics = [#tpu.dimension_semantics<parallel>], iteration_bounds = array<i64: 1>, scalar_prefetch = 0 : i64, scratch_operands = 0 : i64, tpu.core_type = #tpu.core_type<tc>, window_params = [{transform_indices = @transform_0, window_bounds = array<i64: 1, 2048>}, {transform_indices = @transform_1, window_bounds = array<i64: 1, 2048>}]} {
    %c0 = arith.constant 0 : index
    %c0_0 = arith.constant 0 : index
    %0 = vector.load %arg1[%c0, %c0_0] : memref<1x2048xf32, #tpu.memory_space<vmem>>, vector<1x2048xf32>
    %c0_1 = arith.constant 0 : index
    %c0_2 = arith.constant 0 : index
    %1 = vector.load %arg2[%c0_1, %c0_2] : memref<1x2048xf32, #tpu.memory_space<vmem>>, vector<1x2048xf32>
    tpu.vector_store %arg2[%c0_1, %c0_2], %0 {strides = array<i32>} : memref<1x2048xf32, #tpu.memory_space<vmem>>, vector<1x2048xf32>,
    return
  }
  func.func @transform_0(%arg0: i32) -> (i32, i32) {
    %c0_i32 = arith.constant 0 : i32
    %c0_i32_0 = arith.constant 0 : i32
    return %arg0, %c0_i32 : i32, i32
  }
  func.func @transform_1(%arg0: i32) -> (i32, i32) {
    %c0_i32 = arith.constant 0 : i32
    %c0_i32_0 = arith.constant 0 : i32
    return %arg0, %c0_i32 : i32, i32
  }
}

</mosaic_0001>

<llo_original>
// kernel: tpu_custom_call.1
$region0: #{tpu_custom_call.1}
  #allocation0 [shape = 'u32[]', space=smem, size = 0x4, offset = 0x4, fixed_abs, tag = 'smem constant byte address 0x4 - core index']
  #allocation1 [shape = 'u32[144,128]{1,0:T(1,128)}', space=vmem, size = 0x12000, scoped, tag = 'internal scratch']
  %s0 = inlined_call_operand.hbm [shape: f32[1,2048], index: 0, kind: input, shape index: {}, may-alias: {0,1}]
  %s1 = inlined_call_operand.hbm [shape: f32[1,2048], index: 1, kind: output, shape index: {}, may-alias: {0,1}]
  %s2 = sld [smem:[#allocation0]]
  $region18: #{tpu_custom_call.1} parent=0
    _
  %s4 = ssub.s32 1, %s2
  %s5 = scalar_select 0, %s4, %s2
  $region1: #{tpu_custom_call.1} parent=0
    #allocation2 [shape = 'u8[8192]{0}', space=vmem, size = 0x2000, scoped, tag = 'input window, operand 0, single buffered']
    #allocation3 [shape = 's32[1]{0}', space=sflag, size = 0x4, scoped, tag = 'scoped memory for tpu_custom_call.1']
    #allocation4 [shape = 's32[1]{0}', space=sflag, size = 0x4, scoped, tag = 'scoped memory for tpu_custom_call.1']
    #allocation5 [shape = 'u8[8192]{0}', space=vmem, size = 0x2000, scoped, tag = 'output window, operand 0, single buffered']
    %6 = vsyncpa [#allocation3], 0
    %7 = vsyncpa [#allocation4], 0
    // Predicated region
    $region2: #{tpu_custom_call.1} parent=1 // pred_check
      _
    $region3: #{tpu_custom_call.1} parent=1 // pred_check_branch
      %9 = sbr.rel (0) target = $region5
    $region4: #{tpu_custom_call.1} parent=1 // pred_region
      %s11 = ssub.s32 256, 256
      %12 = vsyncadd [#allocation3], %s11
      %s14 = sshll.u32 [#allocation2], 4
      %s15 = int_to_ptr.vmem [resolvable:$true] %s14
      %17 = dma.hbm_to_vmem [thread:$0]  %s0, 256, %s15, [#allocation3]
    $region5: #{tpu_custom_call.1} parent=1 // pred_fallthru
      _
    // Predicated region
    $region6: #{tpu_custom_call.1} parent=1 // pred_check
      _
    $region7: #{tpu_custom_call.1} parent=1 // pred_check_branch
      %19 = sbr.rel (0) target = $region9
    $region8: #{tpu_custom_call.1} parent=1 // pred_region
      %20 = dma.done [#allocation3], 256
    $region9: #{tpu_custom_call.1} parent=1 // pred_fallthru
      _
    %v21 = vld [vmem:[#allocation2] sm:$0xff]
    %v22 = vld [vmem:[#allocation2 + $0x8] sm:$0xff]
    %23 = vst [vmem:[#allocation5] sm:$0xff] %v21
    %24 = vst [vmem:[#allocation5 + $0x8] sm:$0xff] %v22
    // Predicated region
    $region10: #{tpu_custom_call.1} parent=1 // pred_check
      _
    $region11: #{tpu_custom_call.1} parent=1 // pred_check_branch
      %26 = sbr.rel (0) target = $region13
    $region12: #{tpu_custom_call.1} parent=1 // pred_region
      %s28 = ssub.s32 256, 256
      %29 = vsyncadd [#allocation4], %s28
      %s31 = sshll.u32 [#allocation5], 4
      %s32 = int_to_ptr.vmem [resolvable:$true] %s31
      %34 = dma.vmem_to_hbm [thread:$0]  %s32, 256, %s1, [#allocation4]
    $region13: #{tpu_custom_call.1} parent=1 // pred_fallthru
      _
    // Predicated region
    $region14: #{tpu_custom_call.1} parent=1 // pred_check
      _
    $region15: #{tpu_custom_call.1} parent=1 // pred_check_branch
      %36 = sbr.rel (0) target = $region17
    $region16: #{tpu_custom_call.1} parent=1 // pred_region
      %37 = dma.done [#allocation4], 256
    $region17: #{tpu_custom_call.1} parent=1 // pred_fallthru
      _
    %38 = vsyncpa [#allocation3], 1
    %39 = vsyncpa [#allocation4], 1

</llo_original>
